<compile_context>
chip_gen: v5e
topology: v5e:2x2
jax: 0.10.0
libtpu: 0.0.40
codegen_flags: <defaults>
</compile_context>

<pallas_src>
import functools

import jax
import jax.numpy as jnp
import numpy as np
from jax.experimental import pallas as pl
from jax.experimental.pallas import tpu as pltpu

HIDDEN = 64          # per-network hidden width (actor & critic)
TWO_H = 2 * HIDDEN   # fused hidden width: [actor_h | critic_h] -> 128 lanes (one full MXU tile)
NPAD = 128           # padded layer-2 output width: cols [0,A) = actor logits, col A = critic value
OUT_W = 8            # combined output slab: col0 = logp, col1 = value, col2 = entropy


def _round_up(x, m):
    return ((x + m - 1) // m) * m


def _ac_eval_kernel(x_ref, w_ref, b_ref, out_ref, *, action_dim, fast_transcendentals):
    A = action_dim
    x = x_ref[...]                                   # [TB, Sx]  (state cols | action-as-float col)
    tb, sx = x.shape

    # Packed params: rows [0, Sx) = extended W1cat [Sx, 2H] (last row zeros -> action col inert);
    # rows [Sx, Sx+2H) = block-diagonal W2cat [2H, NPAD].
    w1 = w_ref[:sx, :]
    w2 = w_ref[sx:sx + TWO_H, :]
    b1 = b_ref[0:1, :]                               # [1, 2H]   f32
    b2 = b_ref[1:2, :]                               # [1, NPAD] f32

    # Fused layer 1 (actor | critic) -- one 128-wide MXU matmul, f32 accumulation.
    pre = jnp.dot(x, w1, preferred_element_type=jnp.float32) + b1                 # [TB, 128] f32
    if fast_transcendentals:
        h = jnp.tanh(pre.astype(jnp.bfloat16))       # v6e/v7x: bf16 EUP ~2x throughput
    else:
        h = jnp.tanh(pre)
    # Fused layer 2 (block-diagonal): cols [0, A) = actor logits, col A = critic value.
    out2 = jnp.dot(h.astype(w2.dtype), w2, preferred_element_type=jnp.float32) + b2  # [TB, NPAD]

    col = jax.lax.broadcasted_iota(jnp.int32, out2.shape, 1)                      # [TB, NPAD]
    valid = col < A                                                               # actor-logit lanes

    # Masked softmax statistics over the A valid lanes.
    masked = jnp.where(valid, out2, -1e30)
    m = jnp.max(masked, axis=-1, keepdims=True)
    d = masked - m                                   # invalid lanes stay ~ -1e30 (finite)
    if fast_transcendentals:
        e = jnp.exp(d.astype(jnp.bfloat16)).astype(jnp.float32)
    else:
        e = jnp.exp(d)                               # exactly 0 on invalid lanes (underflow), no inf
    z = jnp.sum(e, axis=-1, keepdims=True)
    inv_z = pl.reciprocal(z, approx=False)
    log_z = jnp.log(z)

    # Action index rides as the last column of the state slab (exact float for A < 128).
    act = x[:, sx - 1:sx].astype(jnp.int32)          # [TB, 1] int32

    # Categorical.log_prob(action): select the chosen logit, normalize.
    sel = jnp.sum(jnp.where(col == act, out2, 0.0), axis=-1, keepdims=True)
    logp = sel - m - log_z

    # Categorical.entropy() = log_z - sum(e*d)/z  (e already masked -> no inf reaches the multiply).
    s2 = jnp.sum(e * d, axis=-1, keepdims=True)
    entropy = log_z - s2 * inv_z

    # Critic value = column A of the fused layer-2 output.
    value = jnp.sum(jnp.where(col == A, out2, 0.0), axis=-1, keepdims=True)

    # Single combined output slab -> one write-back DMA per tile.
    ocol = jax.lax.broadcasted_iota(jnp.int32, (tb, OUT_W), 1)
    combined = (jnp.where(ocol == 0, logp, 0.0)
                + jnp.where(ocol == 1, value, 0.0)
                + jnp.where(ocol == 2, entropy, 0.0))
    out_ref[...] = combined.astype(out_ref.dtype)


def pack_params(params, compute_dtype=jnp.bfloat16):
    """Fuse the 8 Linear tensors into one weight buffer [(S+1)+2H, NPAD] and one bias buffer [2, NPAD].

    The extra zero weight row at index S makes the appended action column of the input slab
    contribute nothing to the layer-1 matmul.
    """
    S = params["aw1"].shape[0]
    A = params["aw2"].shape[1]
    assert A + 1 <= NPAD, f"action_dim={A} does not fit packed layer-2 width {NPAD}"
    # layer 1: [S+1, 2H] = [[actor_w1 | critic_w1]; zeros] -- last row covers the action column.
    w1cat = jnp.concatenate([params["aw1"], params["cw1"]], axis=1)
    w1ext = jnp.concatenate([w1cat, jnp.zeros((1, TWO_H), jnp.float32)], axis=0)
    # layer 2: block-diagonal [2H, NPAD]; top-left = actor_w2, rows 64.. col A = critic_w2.
    w2cat = jnp.zeros((TWO_H, NPAD), jnp.float32)
    w2cat = w2cat.at[:HIDDEN, :A].set(params["aw2"])
    w2cat = w2cat.at[HIDDEN:, A:A + 1].set(params["cw2"])
    wcat = jnp.concatenate([w1ext, w2cat], axis=0).astype(compute_dtype)   # [S+1+2H, NPAD]

    b1cat = jnp.concatenate([params["ab1"], params["cb1"]], axis=1)        # [1, 2H]
    b2cat = jnp.zeros((1, NPAD), jnp.float32)
    b2cat = b2cat.at[:, :A].set(params["ab2"]).at[:, A:A + 1].set(params["cb2"])
    bcat = jnp.concatenate([b1cat, b2cat], axis=0)                         # [2, NPAD] f32
    return wcat, bcat, A


def actor_critic_evaluate(state, action_idx, params, *,
                          compute_dtype=jnp.bfloat16, block_b=1024,
                          fast_transcendentals=False):
    """state: [B, S]; action_idx: [B] int. Returns (logprobs [B], values [B,1], entropy [B])."""
    B, S = state.shape
    wcat, bcat, A = pack_params(params, compute_dtype)
    Sx = S + 1
    dt_size = jnp.dtype(compute_dtype).itemsize

    # State slab with the action index appended as one float column (exact for A < 128 even in bf16).
    xa = jnp.concatenate(
        [state.astype(compute_dtype),
         action_idx.astype(compute_dtype).reshape(B, 1)], axis=1)          # [B, Sx]

    # ---- batch-tile selection: big tiles to amortize per-step overhead, but
    #      (a) keep >= 2 grid steps when the batch allows (v7x megacore sharding),
    #      (b) cap against a conservative VMEM budget (v7x 64 MiB phys, v5e 16 MiB default scoped).
    half = _round_up(pl.cdiv(B, 2), 8)
    tb = max(8, min(block_b, half))

    def vmem_est(t):
        return int(2 * 2 * t * Sx * dt_size          # double-buffered state slab (+margin)
                   + 2 * 2 * t * OUT_W * 4           # double-buffered output slab
                   + 2 * (int(wcat.size) * dt_size + int(bcat.size) * 4)
                   + 10 * t * NPAD * 4               # live f32 [tb,128] intermediates (generous)
                   + (2 << 20))

    while tb > 256 and vmem_est(tb) > (28 << 20):
        tb = _round_up(tb // 2, 8)

    Bp = _round_up(B, tb)
    if Bp > B:
        xa = jnp.pad(xa, ((0, Bp - B), (0, 0)))
    grid = (Bp // tb,)

    cp_kwargs = dict(dimension_semantics=("parallel",))
    est = vmem_est(tb)
    if est > (14 << 20):  # above v5e's default scoped limit -> raise explicitly (with margin)
        cp_kwargs["vmem_limit_bytes"] = int(min(est + est // 2, 40 << 20))

    cost = pl.CostEstimate(
        flops=2 * Bp * (Sx * TWO_H + TWO_H * NPAD),
        transcendentals=Bp * (TWO_H + NPAD),
        bytes_accessed=(Bp * Sx * dt_size + int(wcat.size) * dt_size
                        + int(bcat.size) * 4 + Bp * OUT_W * 4),
    )

    out = pl.pallas_call(
        functools.partial(_ac_eval_kernel, action_dim=A,
                          fast_transcendentals=fast_transcendentals),
        out_shape=jax.ShapeDtypeStruct((Bp, OUT_W), jnp.float32),
        grid=grid,
        in_specs=[
            pl.BlockSpec((tb, Sx), lambda i: (i, 0)),            # state+action slab tile
            pl.BlockSpec(wcat.shape, lambda i: (0, 0)),          # packed weights (resident)
            pl.BlockSpec(bcat.shape, lambda i: (0, 0)),          # packed biases  (resident)
        ],
        out_specs=pl.BlockSpec((tb, OUT_W), lambda i: (i, 0)),
        compiler_params=pltpu.CompilerParams(**cp_kwargs),
        cost_estimate=cost,
    )(xa, wcat, bcat)

    out = out[:B]
    return out[:, 0], out[:, 1:2], out[:, 2]


def init_params(key, state_dim, action_dim, hidden=HIDDEN):
    """Deterministic init mimicking torch.nn.Linear's U(-1/sqrt(fan_in), 1/sqrt(fan_in))."""
    ks = jax.random.split(key, 8)

    def lin(kw, kb, fan_in, fan_out):
        bound = 1.0 / np.sqrt(fan_in)
        w = jax.random.uniform(kw, (fan_in, fan_out), jnp.float32, -bound, bound)
        b = jax.random.uniform(kb, (1, fan_out), jnp.float32, -bound, bound)
        return w, b

    aw1, ab1 = lin(ks[0], ks[1], state_dim, hidden)
    aw2, ab2 = lin(ks[2], ks[3], hidden, action_dim)
    cw1, cb1 = lin(ks[4], ks[5], state_dim, hidden)
    cw2, cb2 = lin(ks[6], ks[7], hidden, 1)
    return dict(aw1=aw1, ab1=ab1, aw2=aw2, ab2=ab2,
                cw1=cw1, cb1=cb1, cw2=cw2, cb2=cb2)


def _reference_evaluate(state, action_idx, p):
    h = jnp.tanh(state @ p["aw1"] + p["ab1"])
    logits = h @ p["aw2"] + p["ab2"]
    log_probs = jax.nn.log_softmax(logits, axis=-1)
    probs = jnp.exp(log_probs)
    logp = jnp.take_along_axis(log_probs, action_idx[:, None], axis=-1)[:, 0]
    ent = -jnp.sum(probs * log_probs, axis=-1)
    hc = jnp.tanh(state @ p["cw1"] + p["cb1"])
    val = hc @ p["cw2"] + p["cb2"]
    return logp, val, ent


if __name__ == "__main__":
    B, STATE_DIM, ACTION_DIM = 8, 32, 8    # discrete action space (has_continuous_action_space=False)

    key = jax.random.PRNGKey(0)
    k_state, k_act, k_params, k_state2, k_act2 = jax.random.split(key, 5)
    params = init_params(k_params, STATE_DIM, ACTION_DIM)

    # --- small batch, f32 (single grid step) ---
    state = jax.random.normal(k_state, (B, STATE_DIM), dtype=jnp.float32)
    action = jax.random.randint(k_act, (B,), 0, ACTION_DIM, dtype=jnp.int32)
    r_logp, r_val, r_ent = _reference_evaluate(state, action, params)

    logp, values, entropy = actor_critic_evaluate(state, action, params,
                                                  compute_dtype=jnp.float32)
    jax.block_until_ready((logp, values, entropy))
    np.testing.assert_allclose(np.asarray(logp), np.asarray(r_logp), rtol=1e-5, atol=1e-5)
    np.testing.assert_allclose(np.asarray(values), np.asarray(r_val), rtol=1e-5, atol=1e-5)
    np.testing.assert_allclose(np.asarray(entropy), np.asarray(r_ent), rtol=1e-5, atol=1e-5)

    # --- larger batch, f32: exercises zero-padding + a 2-step parallel grid (megacore path) ---
    B2 = 300
    state2 = jax.random.normal(k_state2, (B2, STATE_DIM), dtype=jnp.float32)
    action2 = jax.random.randint(k_act2, (B2,), 0, ACTION_DIM, dtype=jnp.int32)
    logp2, values2, entropy2 = actor_critic_evaluate(state2, action2, params,
                                                     compute_dtype=jnp.float32)
    jax.block_until_ready((logp2, values2, entropy2))
    r_logp2, r_val2, r_ent2 = _reference_evaluate(state2, action2, params)
    np.testing.assert_allclose(np.asarray(logp2), np.asarray(r_logp2), rtol=1e-5, atol=1e-5)
    np.testing.assert_allclose(np.asarray(values2), np.asarray(r_val2), rtol=1e-5, atol=1e-5)
    np.testing.assert_allclose(np.asarray(entropy2), np.asarray(r_ent2), rtol=1e-5, atol=1e-5)

    # --- default path: bf16 matmul inputs (MXU-native on v5e/v6e/v7x), f32 accum + f32 softmax ---
    logp_b, values_b, entropy_b = actor_critic_evaluate(state, action, params)
    jax.block_until_ready((logp_b, values_b, entropy_b))
    np.testing.assert_allclose(np.asarray(logp_b), np.asarray(r_logp), rtol=5e-2, atol=5e-2)
    np.testing.assert_allclose(np.asarray(values_b), np.asarray(r_val), rtol=5e-2, atol=5e-2)
    np.testing.assert_allclose(np.asarray(entropy_b), np.asarray(r_ent), rtol=5e-2, atol=5e-2)

    # --- bf16 transcendentals (v6e/v7x EUP fast path); looser tolerance ---
    logp_f, values_f, entropy_f = actor_critic_evaluate(state, action, params,
                                                        fast_transcendentals=True)
    jax.block_until_ready((logp_f, values_f, entropy_f))
    np.testing.assert_allclose(np.asarray(logp_f), np.asarray(r_logp), rtol=1e-1, atol=1e-1)
    np.testing.assert_allclose(np.asarray(values_f), np.asarray(r_val), rtol=1e-1, atol=1e-1)
    np.testing.assert_allclose(np.asarray(entropy_f), np.asarray(r_ent), rtol=1e-1, atol=1e-1)

    print("KERNEL_OK")
</pallas_src>

<mosaic_0001>
module attributes {stable_mosaic.version = 11 : i64} {
  func.func @_ac_eval_kernel(%arg0: i32, %arg1: memref<8x33xf32, #tpu.memory_space<vmem>>, %arg2: memref<161x128xf32, #tpu.memory_space<vmem>>, %arg3: memref<2x128xf32, #tpu.memory_space<vmem>>, %arg4: memref<8x8xf32, #tpu.memory_space<vmem>>) attributes {dimension_semantics = [#tpu.dimension_semantics<parallel>], iteration_bounds = array<i64: 1>, scalar_prefetch = 0 : i64, scratch_operands = 0 : i64, tpu.core_type = #tpu.core_type<tc>, window_params = [{transform_indices = @transform_0, window_bounds = array<i64: 8, 33>}, {pipeline_mode = #tpu.pipeline_mode<synchronous>, transform_indices = @transform_1, window_bounds = array<i64: 161, 128>}, {pipeline_mode = #tpu.pipeline_mode<synchronous>, transform_indices = @transform_2, window_bounds = array<i64: 2, 128>}, {transform_indices = @transform_3, window_bounds = array<i64: 8, 8>}]} {
    %c0 = arith.constant 0 : index
    %c0_0 = arith.constant 0 : index
    %0 = vector.load %arg1[%c0, %c0_0] : memref<8x33xf32, #tpu.memory_space<vmem>>, vector<8x33xf32>
    %c0_1 = arith.constant 0 : index
    %c0_2 = arith.constant 0 : index
    %1 = vector.load %arg2[%c0_1, %c0_2] : memref<161x128xf32, #tpu.memory_space<vmem>>, vector<33x128xf32>
    %c33 = arith.constant 33 : index
    %c0_3 = arith.constant 0 : index
    %2 = vector.load %arg2[%c33, %c0_3] : memref<161x128xf32, #tpu.memory_space<vmem>>, vector<128x128xf32>
    %c0_4 = arith.constant 0 : index
    %c0_5 = arith.constant 0 : index
    %3 = vector.load %arg3[%c0_4, %c0_5] : memref<2x128xf32, #tpu.memory_space<vmem>>, vector<1x128xf32>
    %c1 = arith.constant 1 : index
    %c0_6 = arith.constant 0 : index
    %4 = vector.load %arg3[%c1, %c0_6] : memref<2x128xf32, #tpu.memory_space<vmem>>, vector<1x128xf32>
    %cst = arith.constant dense<0.000000e+00> : vector<8x128xf32>
    %5 = tpu.matmul %0, %1, %cst {dimension_numbers = #tpu.dot_dimension_numbers<[1], [0], [0], [1], [0, 0, 1, 1], [], []>} : vector<8x33xf32>, vector<33x128xf32>, vector<8x128xf32> -> vector<8x128xf32>
    %6 = vector.broadcast %3 : vector<1x128xf32> to vector<8x128xf32>
    %7 = arith.addf %5, %6 : vector<8x128xf32>
    %8 = math.tanh %7 : vector<8x128xf32>
    %cst_7 = arith.constant dense<0.000000e+00> : vector<8x128xf32>
    %9 = tpu.matmul %8, %2, %cst_7 {dimension_numbers = #tpu.dot_dimension_numbers<[1], [0], [0], [1], [0, 0, 1, 1], [], []>} : vector<8x128xf32>, vector<128x128xf32>, vector<8x128xf32> -> vector<8x128xf32>
    %10 = vector.broadcast %4 : vector<1x128xf32> to vector<8x128xf32>
    %11 = arith.addf %9, %10 : vector<8x128xf32>
    %12 = tpu.iota {dimensions = array<i32: 1>} : vector<8x128xi32>
    %c8_i32 = arith.constant 8 : i32
    %13 = vector.broadcast %c8_i32 : i32 to vector<8x128xi32>
    %14 = arith.cmpi slt, %12, %13 : vector<8x128xi32>
    %cst_8 = arith.constant -1.000000e+30 : f32
    %15 = vector.broadcast %cst_8 : f32 to vector<8x128xf32>
    %16 = arith.select %14, %11, %15 : vector<8x128xi1>, vector<8x128xf32>
    %cst_9 = arith.constant dense<0xFF800000> : vector<8xf32>
    %17 = vector.multi_reduction <maximumf>, %16, %cst_9 [1] : vector<8x128xf32> to vector<8xf32>
    %18 = vector.shape_cast %17 : vector<8xf32> to vector<8x1xf32>
    %19 = vector.broadcast %18 : vector<8x1xf32> to vector<8x128xf32>
    %20 = arith.subf %16, %19 : vector<8x128xf32>
    %21 = math.exp %20 : vector<8x128xf32>
    %cst_10 = arith.constant dense<0.000000e+00> : vector<8xf32>
    %22 = vector.multi_reduction <add>, %21, %cst_10 [1] : vector<8x128xf32> to vector<8xf32>
    %23 = vector.shape_cast %22 : vector<8xf32> to vector<8x1xf32>
    %24 = tpu.reciprocal %23 : vector<8x1xf32> -> vector<8x1xf32>
    %25 = math.log %23 : vector<8x1xf32>
    %26 = vector.extract_strided_slice %0 {offsets = [0, 32], sizes = [8, 1], strides = [1, 1]} : vector<8x33xf32> to vector<8x1xf32>
    %27 = arith.fptosi %26 : vector<8x1xf32> to vector<8x1xi32>
    %28 = vector.broadcast %27 : vector<8x1xi32> to vector<8x128xi32>
    %29 = arith.cmpi eq, %12, %28 : vector<8x128xi32>
    %cst_11 = arith.constant 0.000000e+00 : f32
    %30 = vector.broadcast %cst_11 : f32 to vector<8x128xf32>
    %31 = arith.select %29, %11, %30 : vector<8x128xi1>, vector<8x128xf32>
    %cst_12 = arith.constant dense<0.000000e+00> : vector<8xf32>
    %32 = vector.multi_reduction <add>, %31, %cst_12 [1] : vector<8x128xf32> to vector<8xf32>
    %33 = vector.shape_cast %32 : vector<8xf32> to vector<8x1xf32>
    %34 = arith.subf %33, %18 : vector<8x1xf32>
    %35 = arith.subf %34, %25 : vector<8x1xf32>
    %36 = arith.mulf %21, %20 : vector<8x128xf32>
    %cst_13 = arith.constant dense<0.000000e+00> : vector<8xf32>
    %37 = vector.multi_reduction <add>, %36, %cst_13 [1] : vector<8x128xf32> to vector<8xf32>
    %38 = vector.shape_cast %37 : vector<8xf32> to vector<8x1xf32>
    %39 = arith.mulf %38, %24 : vector<8x1xf32>
    %40 = arith.subf %25, %39 : vector<8x1xf32>
    %c8_i32_14 = arith.constant 8 : i32
    %41 = vector.broadcast %c8_i32_14 : i32 to vector<8x128xi32>
    %42 = arith.cmpi eq, %12, %41 : vector<8x128xi32>
    %cst_15 = arith.constant 0.000000e+00 : f32
    %43 = vector.broadcast %cst_15 : f32 to vector<8x128xf32>
    %44 = arith.select %42, %11, %43 : vector<8x128xi1>, vector<8x128xf32>
    %cst_16 = arith.constant dense<0.000000e+00> : vector<8xf32>
    %45 = vector.multi_reduction <add>, %44, %cst_16 [1] : vector<8x128xf32> to vector<8xf32>
    %46 = vector.shape_cast %45 : vector<8xf32> to vector<8x1xf32>
    %47 = tpu.iota {dimensions = array<i32: 1>} : vector<8x8xi32>
    %c0_i32 = arith.constant 0 : i32
    %48 = vector.broadcast %c0_i32 : i32 to vector<8x8xi32>
    %49 = arith.cmpi eq, %47, %48 : vector<8x8xi32>
    %cst_17 = arith.constant 0.000000e+00 : f32
    %50 = vector.shape_cast %35 : vector<8x1xf32> to vector<8x1xf32>
    %51 = vector.broadcast %50 : vector<8x1xf32> to vector<8x8xf32>
    %52 = vector.broadcast %cst_17 : f32 to vector<8x8xf32>
    %53 = arith.select %49, %51, %52 : vector<8x8xi1>, vector<8x8xf32>
    %c1_i32 = arith.constant 1 : i32
    %54 = vector.broadcast %c1_i32 : i32 to vector<8x8xi32>
    %55 = arith.cmpi eq, %47, %54 : vector<8x8xi32>
    %cst_18 = arith.constant 0.000000e+00 : f32
    %56 = vector.shape_cast %46 : vector<8x1xf32> to vector<8x1xf32>
    %57 = vector.broadcast %56 : vector<8x1xf32> to vector<8x8xf32>
    %58 = vector.broadcast %cst_18 : f32 to vector<8x8xf32>
    %59 = arith.select %55, %57, %58 : vector<8x8xi1>, vector<8x8xf32>
    %60 = arith.addf %53, %59 : vector<8x8xf32>
    %c2_i32 = arith.constant 2 : i32
    %61 = vector.broadcast %c2_i32 : i32 to vector<8x8xi32>
    %62 = arith.cmpi eq, %47, %61 : vector<8x8xi32>
    %cst_19 = arith.constant 0.000000e+00 : f32
    %63 = vector.shape_cast %40 : vector<8x1xf32> to vector<8x1xf32>
    %64 = vector.broadcast %63 : vector<8x1xf32> to vector<8x8xf32>
    %65 = vector.broadcast %cst_19 : f32 to vector<8x8xf32>
    %66 = arith.select %62, %64, %65 : vector<8x8xi1>, vector<8x8xf32>
    %67 = arith.addf %60, %66 : vector<8x8xf32>
    %c0_20 = arith.constant 0 : index
    %c0_21 = arith.constant 0 : index
    %68 = vector.load %arg4[%c0_20, %c0_21] : memref<8x8xf32, #tpu.memory_space<vmem>>, vector<8x8xf32>
    tpu.vector_store %arg4[%c0_20, %c0_21], %67 {strides = array<i32>} : memref<8x8xf32, #tpu.memory_space<vmem>>, vector<8x8xf32>,
    return
  }
  func.func @transform_0(%arg0: i32) -> (i32, i32) {
    %c0_i32 = arith.constant 0 : i32
    %c0_i32_0 = arith.constant 0 : i32
    return %arg0, %c0_i32 : i32, i32
  }
  func.func @transform_1(%arg0: i32) -> (i32, i32) {
    %c0_i32 = arith.constant 0 : i32
    %c0_i32_0 = arith.constant 0 : i32
    %c0_i32_1 = arith.constant 0 : i32
    return %c0_i32, %c0_i32_0 : i32, i32
  }
  func.func @transform_2(%arg0: i32) -> (i32, i32) {
    %c0_i32 = arith.constant 0 : i32
    %c0_i32_0 = arith.constant 0 : i32
    %c0_i32_1 = arith.constant 0 : i32
    return %c0_i32, %c0_i32_0 : i32, i32
  }
  func.func @transform_3(%arg0: i32) -> (i32, i32) {
    %c0_i32 = arith.constant 0 : i32
    %c0_i32_0 = arith.constant 0 : i32
    return %arg0, %c0_i32 : i32, i32
  }
}

</mosaic_0001>

<llo_original>
// kernel: tpu_custom_call.1
$region0: #{tpu_custom_call.1}
  #allocation0 [shape = 'u32[]', space=smem, size = 0x4, offset = 0x4, fixed_abs, tag = 'smem constant byte address 0x4 - core index']
  #allocation1 [shape = 'u32[72,128]{1,0:T(1,128)}', space=vmem, size = 0x9000, scoped, tag = 'internal scratch']
  %s0 = inlined_call_operand.hbm [shape: f32[8,33], index: 0, kind: input, shape index: {}]
  %s1 = inlined_call_operand.hbm [shape: f32[161,128], index: 1, kind: input, shape index: {}]
  %s2 = inlined_call_operand.hbm [shape: f32[2,128], index: 2, kind: input, shape index: {}]
  %s3 = inlined_call_operand.hbm [shape: f32[8,8], index: 3, kind: output, shape index: {}]
  %s4 = sld [smem:[#allocation0]]
  $region34: #{tpu_custom_call.1} parent=0
    _
  %s6 = ssub.s32 1, %s4
  %s7 = scalar_select 0, %s6, %s4
  $region1: #{tpu_custom_call.1} parent=0
    #allocation2 [shape = 'u8[4096]{0}', space=vmem, size = 0x1000, scoped, tag = 'input window, operand 0, single buffered']
    #allocation3 [shape = 's32[1]{0}', space=sflag, size = 0x4, scoped, tag = 'scoped memory for tpu_custom_call.1']
    #allocation4 [shape = 's32[1]{0}', space=sflag, size = 0x4, scoped, tag = 'scoped memory for tpu_custom_call.1']
    #allocation5 [shape = 'u8[86016]{0}', space=vmem, size = 0x15000, scoped, tag = 'input window, operand 1, single buffered']
    #allocation6 [shape = 's32[1]{0}', space=sflag, size = 0x4, scoped, tag = 'scoped memory for tpu_custom_call.1']
    #allocation7 [shape = 'u8[1024]{0}', space=vmem, size = 0x400, scoped, tag = 'input window, operand 2, single buffered']
    #allocation8 [shape = 'u8[4096]{0}', space=vmem, size = 0x1000, scoped, tag = 'output window, operand 0, single buffered']
    %8 = vsyncpa [#allocation3], 0
    %9 = vsyncpa [#allocation6], 0
    %10 = vsyncpa [#allocation4], 0
    // Predicated region
    $region2: #{tpu_custom_call.1} parent=1 // pred_check
      _
    $region3: #{tpu_custom_call.1} parent=1 // pred_check_branch
      %12 = sbr.rel (0) target = $region5
    $region4: #{tpu_custom_call.1} parent=1 // pred_region
      %14 = vsyncadd [#allocation3], 0
      %s16 = sshll.u32 %s0, 4
      %s17 = int_to_ptr.hbm [resolvable:$true] %s16
      %s18 = sshll.u32 [#allocation2], 4
      %s19 = int_to_ptr.vmem [resolvable:$true] %s18
      %21 = dma.hbm_to_vmem [thread:$0]  %s17, 128, %s19, [#allocation3]
    $region5: #{tpu_custom_call.1} parent=1 // pred_fallthru
      _
    // Predicated region
    $region6: #{tpu_custom_call.1} parent=1 // pred_check
      _
    $region7: #{tpu_custom_call.1} parent=1 // pred_check_branch
      %23 = sbr.rel (0) target = $region9
    $region8: #{tpu_custom_call.1} parent=1 // pred_region
      %25 = vsyncadd [#allocation6], 0
      %s26 = sshll.u32 %s1, 4
      %s27 = int_to_ptr.hbm [resolvable:$true] %s26
      %s28 = sshll.u32 [#allocation5], 4
      %s29 = int_to_ptr.vmem [resolvable:$true] %s28
      %34 = dma.hbm_to_vmem [thread:$0]  %s27, 2688, %s29, [#allocation6], 128, 128, 8
    $region9: #{tpu_custom_call.1} parent=1 // pred_fallthru
      _
    // Predicated region
    $region10: #{tpu_custom_call.1} parent=1 // pred_check
      _
    $region11: #{tpu_custom_call.1} parent=1 // pred_check_branch
      %36 = sbr.rel (0) target = $region13
    $region12: #{tpu_custom_call.1} parent=1 // pred_region
      %38 = vsyncadd [#allocation6], 0
      %s40 = sshll.u32 %s2, 4
      %s41 = int_to_ptr.hbm [resolvable:$true] %s40
      %s42 = sshll.u32 [#allocation7], 4
      %s43 = int_to_ptr.vmem [resolvable:$true] %s42
      %45 = dma.hbm_to_vmem [thread:$0]  %s41, 32, %s43, [#allocation6]
    $region13: #{tpu_custom_call.1} parent=1 // pred_fallthru
      _
    // Predicated region
    $region14: #{tpu_custom_call.1} parent=1 // pred_check
      _
    $region15: #{tpu_custom_call.1} parent=1 // pred_check_branch
      %47 = sbr.rel (0) target = $region17
    $region16: #{tpu_custom_call.1} parent=1 // pred_region
      %49 = dma.done [#allocation3], 128
    $region17: #{tpu_custom_call.1} parent=1 // pred_fallthru
      _
    // Predicated region
    $region18: #{tpu_custom_call.1} parent=1 // pred_check
      _
    $region19: #{tpu_custom_call.1} parent=1 // pred_check_branch
      %51 = sbr.rel (0) target = $region21
    $region20: #{tpu_custom_call.1} parent=1 // pred_region
      %53 = dma.done [#allocation6], 2688
    $region21: #{tpu_custom_call.1} parent=1 // pred_fallthru
      _
    // Predicated region
    $region22: #{tpu_custom_call.1} parent=1 // pred_check
      _
    $region23: #{tpu_custom_call.1} parent=1 // pred_check_branch
      %55 = sbr.rel (0) target = $region25
    $region24: #{tpu_custom_call.1} parent=1 // pred_region
      %57 = dma.done [#allocation6], 32
    $region25: #{tpu_custom_call.1} parent=1 // pred_fallthru
      _
    %v58 = vld [vmem:[#allocation2] sm:$0xff]
    %v59 = vld [vmem:[#allocation5] sm:$0xff]
    %v60 = vld [vmem:[#allocation5 + $0x8] sm:$0xff]
    %v61 = vld [vmem:[#allocation5 + $0x10] sm:$0xff]
    %v62 = vld [vmem:[#allocation5 + $0x18] sm:$0xff]
    %v63 = vld [vmem:[#allocation5 + $0x20] sm:$0x1]
    %v64 = vld [vmem:[#allocation5 + $0x21] sm:$0xff]
    %v65 = vld [vmem:[#allocation5 + $0x29] sm:$0xff]
    %v66 = vld [vmem:[#allocation5 + $0x31] sm:$0xff]
    %v67 = vld [vmem:[#allocation5 + $0x39] sm:$0xff]
    %v68 = vld [vmem:[#allocation5 + $0x41] sm:$0xff]
    %v69 = vld [vmem:[#allocation5 + $0x49] sm:$0xff]
    %v70 = vld [vmem:[#allocation5 + $0x51] sm:$0xff]
    %v71 = vld [vmem:[#allocation5 + $0x59] sm:$0xff]
    %v72 = vld [vmem:[#allocation5 + $0x61] sm:$0xff]
    %v73 = vld [vmem:[#allocation5 + $0x69] sm:$0xff]
    %v74 = vld [vmem:[#allocation5 + $0x71] sm:$0xff]
    %v75 = vld [vmem:[#allocation5 + $0x79] sm:$0xff]
    %v76 = vld [vmem:[#allocation5 + $0x81] sm:$0xff]
    %v77 = vld [vmem:[#allocation5 + $0x89] sm:$0xff]
    %v78 = vld [vmem:[#allocation5 + $0x91] sm:$0xff]
    %v79 = vld [vmem:[#allocation5 + $0x99] sm:$0xff]
    %v80 = vld [vmem:[#allocation7] sm:$0x1]
    %v81 = vld [vmem:[#allocation7 + $0x1] sm:$0x1]
    %v82 = vperm.slane %v80, 0
    %vm83 = vcmask 269312
    %v85 = vsel %vm83, %v58, 0
    %vm87 = vcmask 1040384
    %v89 = vsel %vm87, %v63, 0
    %91 = vmatpush.msra.mxu0 0.0
    %92 = vmatpush.msra.mxu0 0.0
    %93 = vmatpush.msra.mxu0 0.0
    %94 = vmatpush.msra.mxu0 0.0
    %95 = vmatpush.msra.mxu0 0.0
    %96 = vmatpush.msra.mxu0 0.0
    %97 = vmatpush.msra.mxu0 0.0
    %98 = vmatpush.msra.mxu0 0.0
    %99 = vmatpush.msra.mxu0 0.0
    %100 = vmatpush.msra.mxu0 0.0
    %101 = vmatpush.msra.mxu0 0.0
    %102 = vmatpush.msra.mxu0 %v89
    %103 = vmatpush.msra.mxu0 %v62
    %104 = vmatpush.msra.mxu0 %v61
    %105 = vmatpush.msra.mxu0 %v60
    %106 = vmatpush.msra.mxu0 %v59
    %107 = vmatmul.f32.gmra.mxu0 %v85
    %v108 = vpop.f32.mrf.mxu0
    %v109 = vadd.f32 %v82, %v108
    %110 = vdwg.mxu0
    %v111 = vtanh.pop %v109
    %v112 = vperm.slane %v81, 0
    %113 = vmatpush.msra.mxu0 %v79
    %114 = vmatpush.msra.mxu0 %v78
    %115 = vmatpush.msra.mxu0 %v77
    %116 = vmatpush.msra.mxu0 %v76
    %117 = vmatpush.msra.mxu0 %v75
    %118 = vmatpush.msra.mxu0 %v74
    %119 = vmatpush.msra.mxu0 %v73
    %120 = vmatpush.msra.mxu0 %v72
    %121 = vmatpush.msra.mxu0 %v71
    %122 = vmatpush.msra.mxu0 %v70
    %123 = vmatpush.msra.mxu0 %v69
    %124 = vmatpush.msra.mxu0 %v68
    %125 = vmatpush.msra.mxu0 %v67
    %126 = vmatpush.msra.mxu0 %v66
    %127 = vmatpush.msra.mxu0 %v65
    %128 = vmatpush.msra.mxu0 %v64
    %129 = vmatmul.f32.gmra.mxu0 %v111
    %v130 = vpop.f32.mrf.mxu0
    %v131 = vadd.f32 %v112, %v130
    %132 = vdwg.mxu0
    %v133 = vlaneseq
    %v134 = vand.u32 %v133, 127
    %vm135 = vcmp.lt.s32.totalorder %v134, 8
    %v136 = vsel %vm135, %v131, -1e+30
    %137 = vmax.xlane.f32.xlu0 %v136
    %v138 = vpop.xlane.xlu0 %137
    %v139 = vsub.f32 %v136, %v138
    %v140 = vmul.f32 %v139, 1.442695
    %v141 = vpow.pop %v140
    %142 = vadd.xlane.f32.xlu0 %v141
    %v143 = vpop.xlane.xlu0 %142
    %v144 = vrcp.pop %v143
    %v145 = vmul.f32 %v143, %v144
    %v146 = vsub.f32 1.0, %v145
    %v147 = vmul.f32 %v144, %v146
    %v148 = vadd.f32 %v144, %v147
    %vm149 = vweird.f32 %v143
    %vm150 = vweird.f32 %v144
    %vm151 = vmor %vm149, %vm150
    %v152 = vsel %vm151, %v144, %v148
    %v153 = vand.u32 2147483647, %v143
    %vm154 = vcmp.eq.f32.partialorder %v153, 8.507059e+37
    %v155 = vand.u32 %v143, 2147483648
    %v156 = vor.u32 1.1754944e-38, %v155
    %v157 = vsel %vm154, %v156, %v152
    %v158 = vlog2.pop %v143
    %v159 = vmul.f32 %v158, 0.6931472
    %v160 = vcvt.f32.s32.to.zero.pseudo %v58
    %161 = vset.pattern.permute.xlu0 32
    %162 = vperm.xlu0 %161, %v160
    %v163 = vpop.permute.xlu0 %162
    %vm164 = vcmp.eq.s32.totalorder %v134, %v163
    %v165 = vsel %vm164, %v131, 0.0
    %166 = vadd.xlane.f32.xlu0 %v165
    %v167 = vpop.xlane.xlu0 %166
    %v168 = vsub.f32 %v167, %v138
    %v169 = vsub.f32 %v168, %v159
    %v170 = vmul.f32 %v141, %v139
    %171 = vadd.xlane.f32.xlu0 %v170
    %v172 = vpop.xlane.xlu0 %171
    %v173 = vmul.f32 %v172, %v157
    %v174 = vsub.f32 %v159, %v173
    %vm175 = vcmp.eq.s32.totalorder %v134, 8
    %v176 = vsel %vm175, %v131, 0.0
    %177 = vadd.xlane.f32.xlu0 %v176
    %v178 = vpop.xlane.xlu0 %177
    %vm179 = vcmp.eq.s32.totalorder %v134, 0
    %v180 = vsel %vm179, %v169, 0.0
    %vm181 = vcmp.eq.s32.totalorder %v134, 1
    %v182 = vsel %vm181, %v178, 0.0
    %v183 = vadd.f32 %v180, %v182
    %vm184 = vcmp.eq.s32.totalorder %v134, 2
    %v185 = vsel %vm184, %v174, 0.0
    %v186 = vadd.f32 %v183, %v185
    %vm187 = vcmask 64512
    %188 = vst.msk [vmem:[#allocation8] sm:$0xff] %vm187, %v186
    // Predicated region
    $region26: #{tpu_custom_call.1} parent=1 // pred_check
      _
    $region27: #{tpu_custom_call.1} parent=1 // pred_check_branch
      %190 = sbr.rel (0) target = $region29
    $region28: #{tpu_custom_call.1} parent=1 // pred_region
      %192 = vsyncadd [#allocation4], 0
      %s194 = sshll.u32 [#allocation8], 4
      %s195 = int_to_ptr.vmem [resolvable:$true] %s194
      %s196 = sshll.u32 %s3, 4
      %s197 = int_to_ptr.hbm [resolvable:$true] %s196
      %199 = dma.vmem_to_hbm [thread:$0]  %s195, 128, %s197, [#allocation4]
    $region29: #{tpu_custom_call.1} parent=1 // pred_fallthru
      _
    // Predicated region
    $region30: #{tpu_custom_call.1} parent=1 // pred_check
      _
    $region31: #{tpu_custom_call.1} parent=1 // pred_check_branch
      %201 = sbr.rel (0) target = $region33
    $region32: #{tpu_custom_call.1} parent=1 // pred_region
      %203 = dma.done [#allocation4], 128
    $region33: #{tpu_custom_call.1} parent=1 // pred_fallthru
      _
    %204 = vsyncpa [#allocation3], 1
    %205 = vsyncpa [#allocation6], 1
    %206 = vsyncpa [#allocation4], 1

</llo_original>
